<compile_context>
chip_gen: v7x
topology: tpu7x:2x2x1
jax: 0.10.0
libtpu: 0.0.40
codegen_flags: <defaults>
</compile_context>

<pallas_src>
import jax
import jax.numpy as jnp
import numpy as np
from jax.experimental import pallas as pl
from jax.experimental.pallas import tpu as pltpu


def _identity_dma_kernel(x_ref, o_ref, sem):
    # Whole-buffer async copy between the (unmodified-layout) input and output
    # buffers.  Both refs live in pl.ANY (HBM for real inputs), so the copy is
    # a single DMA at the 2*nbytes HBM roofline with zero VMEM pressure.
    cp = pltpu.make_async_copy(x_ref, o_ref, sem)
    cp.start()
    cp.wait()


def _identity_forward_pallas(x: jax.Array) -> jax.Array:
    """Identity forward realized as one HBM->HBM DMA (no tiling, no padding)."""
    return pl.pallas_call(
        _identity_dma_kernel,
        out_shape=jax.ShapeDtypeStruct(x.shape, x.dtype),
        in_specs=[pl.BlockSpec(memory_space=pl.ANY)],
        out_specs=pl.BlockSpec(memory_space=pl.ANY),
        scratch_shapes=[pltpu.SemaphoreType.DMA],
    )(x)


_identity_forward_pallas_jit = jax.jit(_identity_forward_pallas)


def base_model_forward(x: jax.Array, *, force_pallas: bool = False) -> jax.Array:
    """Pallas 'forward' for BaseModel: identity pass-through.

    Default: return the input directly (no kernel launch, no HBM traffic).
    force_pallas=True: exercise the single-DMA identity kernel.
    """
    if not force_pallas:
        return x
    return _identity_forward_pallas_jit(x)


class BaseModelJAX:
    """JAX/Pallas mirror of BaseModel: holds config, no trainable parameters."""

    def __init__(self, config):
        self.config = config
        self.params = {}  # BaseModel.__init__ registers no parameters.

    def forward(self, *inputs, force_pallas: bool = False):
        return tuple(base_model_forward(x, force_pallas=force_pallas) for x in inputs)

    def __str__(self):
        n_params = int(sum(np.prod(p.shape) for p in self.params.values()))
        return f"BaseModelJAX(config={self.config})\nTrainable parameters: {n_params}"


if __name__ == "__main__":
    key = jax.random.PRNGKey(0)
    k1, k2 = jax.random.split(key)

    model = BaseModelJAX(config={"name": "base", "in_channels": 4})

    # Small NCHW input: default path is a zero-cost pass-through.
    x_small = jax.random.normal(k1, (2, 4, 16, 16), dtype=jnp.float32)
    (out_small,) = model.forward(x_small)
    out_small = jax.block_until_ready(out_small)
    assert out_small.shape == x_small.shape and out_small.dtype == x_small.dtype
    np.testing.assert_array_equal(np.asarray(out_small), np.asarray(x_small))

    # Same input forced through the Pallas DMA-copy kernel (arbitrary 4-D
    # shape, no padding or retiling required).
    (out_forced,) = model.forward(x_small, force_pallas=True)
    out_forced = jax.block_until_ready(out_forced)
    assert out_forced.shape == x_small.shape and out_forced.dtype == x_small.dtype
    np.testing.assert_array_equal(np.asarray(out_forced), np.asarray(x_small))

    # A different dtype / rank with a non-128-multiple trailing dim, also
    # forced through the kernel to show the DMA path is shape/dtype agnostic.
    x_bf16 = jax.random.normal(k2, (2, 8, 32), dtype=jnp.bfloat16)
    (out_bf16,) = model.forward(x_bf16, force_pallas=True)
    out_bf16 = jax.block_until_ready(out_bf16)
    assert out_bf16.shape == x_bf16.shape and out_bf16.dtype == x_bf16.dtype
    np.testing.assert_array_equal(np.asarray(out_bf16), np.asarray(x_bf16))

    assert "Trainable parameters: 0" in str(model)
    print("KERNEL_OK")
</pallas_src>

<mosaic_0001>
module attributes {stable_mosaic.version = 11 : i64} {
  func.func @_identity_dma_kernel(%arg0: memref<2x4x16x16xf32, #tpu.memory_space<any>>, %arg1: memref<2x4x16x16xf32, #tpu.memory_space<any>>, %arg2: memref<!tpu.dma_semaphore, #tpu.memory_space<semaphore_mem>>) attributes {dimension_semantics = [], scalar_prefetch = 0 : i64, scratch_operands = 1 : i64, tpu.core_type = #tpu.core_type<tc>} {
    tpu.enqueue_dma source(%arg0 : memref<2x4x16x16xf32, #tpu.memory_space<any>>) target(%arg1 : memref<2x4x16x16xf32, #tpu.memory_space<any>>) target_semaphore(%arg2 : memref<!tpu.dma_semaphore, #tpu.memory_space<semaphore_mem>>)
    tpu.wait_dma2 semaphore(%arg2 : memref<!tpu.dma_semaphore, #tpu.memory_space<semaphore_mem>>) src(%arg0 : memref<2x4x16x16xf32, #tpu.memory_space<any>>) dst(%arg1 : memref<2x4x16x16xf32, #tpu.memory_space<any>>)
    return
  }
}

</mosaic_0001>

<llo_original>
// kernel: _identity_forward_pallas.1
$region0: #{_identity_forward_pallas.1}
  #allocation0 [shape = 'u32[]', space=smem, size = 0x4, offset = 0x4, fixed_abs, tag = 'smem constant byte address 0x4 - core index']
  #allocation1 [shape = 'u32[144,128]{1,0:T(1,128)}', space=vmem, size = 0x12000, scoped, tag = 'internal scratch']
  #allocation2 [shape = 's32[1]{0}', space=sflag, size = 0x4, scoped, tag = 'scratch operand']
  #allocation3 [shape = 's32[]', space=sflag, size = 0x4, offset = 0, fixed_abs, tag = 'sflag constant byte address 0x0 - dummy sync flag']
  #allocation4 [shape = 'u32[0]{0}', space=smem, size = 0, offset = 0, fixed_abs, tag = 'smem constant byte address 0x0 - null']
  %s0 = inlined_call_operand.hbm [shape: f32[2,4,16,16], index: 0, kind: input, shape index: {}]
  %s1 = inlined_call_operand.hbm [shape: f32[2,4,16,16], index: 1, kind: output, shape index: {}]
  %s2 = sld [smem:[#allocation0]]
  $region2: #{_identity_forward_pallas.1} parent=0
    _
  %s4 = ssub.s32 1, %s2
  %s5 = scalar_select 0, %s4, %s2
  %s7 = sshll.u32 1, 14
  %s8 = sxor.u32 4294967295, %s7
  %s11 = sshll.u32 3, 24
  %s12 = sxor.u32 4294967295, %s11
  %s13 = sand.u32 0, %s12
  %s15 = sor.u32 %s13, 0
  %18 = dma.general %s0, 2048, %s1, [#allocation2], [#allocation3], [#allocation4], %s15, 0
  %s19 = smul.u32 2, 4
  %s20 = smul.u32 %s19, 16
  %s21 = smul.u32 %s20, 1
  %s22 = sshll.u32 %s21, 4
  %23 = dma.done [#allocation2], %s22
  %24 = vsyncmov [#allocation2]
  %s25 = vpop.sfrf %24
  %p26 = scmp.eq.s32.totalorder %s25, 0
  %p27 = pneg %p26
  %29 = shalt.err (%p27)

</llo_original>
